<compile_context>
chip_gen: v7x
topology: tpu7x:2x2x1
jax: 0.10.0
libtpu: 0.0.40
codegen_flags: <defaults>
</compile_context>

<pallas_src>
import math

import jax
import jax.numpy as jnp
from jax import lax
from jax.experimental import pallas as pl
from jax.experimental.pallas import tpu as pltpu

HIDDEN_SIZES = (29, 69, 75)


def _round_up(a, m):
    return (a + m - 1) // m * m


def _make_kernel(ch, n_chunks, unroll):
    """Kernel for one (TB, D_in) batch tile, processed in `n_chunks` chunks of
    `ch` lanes each (TB = ch * n_chunks)."""

    def kernel(x_ref,
               w1_ref, b1_ref,
               w2_ref, b2_ref,
               w3_ref, b3_ref,
               w4_ref, b4_ref,
               o_ref):
        # Hoist parameter loads out of the chunk loop (regalloc may keep them in
        # vregs or cheaply rematerialize the small VMEM loads; either is fine).
        w1 = w1_ref[...]          # (29, D_in) bf16
        w2 = w2_ref[...]          # (69, 29)   bf16
        w3 = w3_ref[...]          # (75, 69)   bf16
        b1 = b1_ref[...]          # (29, 1)    f32
        b2 = b2_ref[...]          # (69, 1)    f32
        b3 = b3_ref[...]          # (75, 1)    f32
        w4 = w4_ref[...]          # (75, 1)    f32  (final-layer column)
        b4 = b4_ref[...]          # (1, 1)     f32

        def compute(xc):
            # xc: (ch, D_in) f32  ->  (1, ch) f32
            xb = xc.astype(jnp.bfloat16)
            # Layer 1: h1^T = W1 @ x^T as an NT contraction (K on lanes of both).
            h = lax.dot_general(w1, xb, (((1,), (1,)), ((), ())),
                                preferred_element_type=jnp.float32)   # (29, ch)
            h = jnp.maximum(h + b1, 0.0).astype(jnp.bfloat16)
            h = jnp.dot(w2, h, preferred_element_type=jnp.float32)    # (69, ch)
            h = jnp.maximum(h + b2, 0.0).astype(jnp.bfloat16)
            h = jnp.dot(w3, h, preferred_element_type=jnp.float32)    # (75, ch)
            h = jnp.maximum(h + b3, 0.0)                               # f32
            # Final out_features == 1 layer: VPU multiply + cross-sublane reduce
            # (MXU has plenty of slack, but a degenerate N=1 matmul buys nothing).
            return jnp.sum(h * w4, axis=0, keepdims=True) + b4        # (1, ch)

        if n_chunks == 1:
            o_ref[...] = compute(x_ref[...]).astype(o_ref.dtype)
        else:
            def body(c, carry):
                i = pl.multiple_of(c * ch, ch)
                y = compute(x_ref[pl.ds(i, ch), :])
                o_ref[:, pl.ds(i, ch)] = y.astype(o_ref.dtype)
                return carry

            lax.fori_loop(0, n_chunks, body, 0, unroll=unroll)

    return kernel


def mlp_forward(x, params, *, block_b=8192, chunk=256):
    """x: (B, input_size) f32. params: [(W (out,in), b (out,)), ...] (torch layout).

    Returns (B, 1) f32, matching nn.Sequential(Linear, ReLU, ..., Linear(.,1)).
    Matmul operands are cast to bf16 (f32 accumulation) for MXU efficiency.
    """
    B, D = x.shape
    (w1, b1), (w2, b2), (w3, b3), (w4, b4) = params

    # ---- tile / chunk selection -------------------------------------------
    single_tile_max = min(1024, block_b)
    if B <= single_tile_max:
        # Small batch: one tile, one chunk. (Masked partial stores are fine here.)
        TB = _round_up(max(B, 1), 8)
        CH = TB
        num_tiles = 1
    else:
        assert chunk % 128 == 0, "chunk must be a multiple of 128 (lane width)"
        assert block_b % chunk == 0, "block_b must be a multiple of chunk"
        CH = chunk
        # Even tile count (>=2) so tiles balance across v7x's 2 TensorCores,
        # each tile at most block_b rows and a multiple of the chunk size.
        num_tiles = max(2, 2 * pl.cdiv(B, 2 * block_b))
        TB = _round_up(pl.cdiv(B, num_tiles), CH)
        num_tiles = pl.cdiv(B, TB)
        if num_tiles > 1 and num_tiles % 2:
            num_tiles += 1

    Bp = num_tiles * TB
    if Bp != B:
        x = jnp.pad(x, ((0, Bp - B), (0, 0)))

    n_chunks = TB // CH
    unroll = True if n_chunks <= 8 else 8

    # ---- parameters: bf16 weights for the MXU, f32 biases / final column ---
    consts = [
        w1.astype(jnp.bfloat16), b1.reshape(-1, 1).astype(jnp.float32),
        w2.astype(jnp.bfloat16), b2.reshape(-1, 1).astype(jnp.float32),
        w3.astype(jnp.bfloat16), b3.reshape(-1, 1).astype(jnp.float32),
        w4.reshape(-1, 1).astype(jnp.float32),     # (75, 1) == W4^T column
        b4.reshape(1, 1).astype(jnp.float32),
    ]

    x_spec = pl.BlockSpec((TB, D), lambda i: (i, 0))
    # Full-array blocks + constant index_map: DMA'd once, VMEM-resident after.
    const_specs = [pl.BlockSpec(c.shape, lambda i: (0, 0)) for c in consts]
    out_spec = pl.BlockSpec((1, TB), lambda i: (0, i))

    y = pl.pallas_call(
        _make_kernel(CH, n_chunks, unroll),
        out_shape=jax.ShapeDtypeStruct((1, Bp), jnp.float32),
        grid=(num_tiles,),
        in_specs=[x_spec] + const_specs,
        out_specs=out_spec,
        compiler_params=pltpu.CompilerParams(
            dimension_semantics=("parallel",),   # shard batch tiles over TCs (v7x)
            vmem_limit_bytes=48 * 1024 * 1024,   # explicit (v5e default is 16 MiB);
                                                 # stays under v7x's 64 MiB/TC
        ),
    )(x, *consts)

    return y[0, :B].reshape(B, 1)


def init_params(key, input_size, hidden_sizes=HIDDEN_SIZES):
    """Deterministic init matching torch.nn.Linear default U(-1/sqrt(fan_in), .)."""
    dims = [input_size, *hidden_sizes, 1]
    params = []
    for i in range(len(dims) - 1):
        fan_in, fan_out = dims[i], dims[i + 1]
        key, kw, kb = jax.random.split(key, 3)
        bound = 1.0 / math.sqrt(fan_in)
        w = jax.random.uniform(kw, (fan_out, fan_in), jnp.float32, -bound, bound)
        b = jax.random.uniform(kb, (fan_out,), jnp.float32, -bound, bound)
        params.append((w, b))
    return params


def mlp_reference_f32(x, params):
    h = x
    for i, (w, b) in enumerate(params):
        h = h @ w.T + b
        if i < len(params) - 1:
            h = jnp.maximum(h, 0.0)
    return h


def mlp_reference_bf16(x, params):
    """Mirrors the kernel's precision: bf16 matmul operands, f32 accumulation,
    f32 bias/ReLU, f32 final layer."""
    h = x
    for (w, b) in params[:-1]:
        h = jnp.dot(h.astype(jnp.bfloat16), w.T.astype(jnp.bfloat16),
                    preferred_element_type=jnp.float32) + b
        h = jnp.maximum(h, 0.0)
    w4, b4 = params[-1]
    return h @ w4.T + b4


def _check(out, x, params, tag):
    ref_f32 = mlp_reference_f32(x, params)
    ref_b16 = mlp_reference_bf16(x, params)
    assert out.shape == ref_f32.shape, (tag, out.shape, ref_f32.shape)
    err_f32 = float(jnp.max(jnp.abs(out - ref_f32)))
    err_b16 = float(jnp.max(jnp.abs(out - ref_b16)))
    assert jnp.allclose(out, ref_b16, atol=5e-3, rtol=5e-3), (tag, err_b16)
    assert jnp.allclose(out, ref_f32, atol=5e-2, rtol=5e-2), (tag, err_f32)


if __name__ == "__main__":
    key = jax.random.PRNGKey(0)
    k_p, k1, k2, k3 = jax.random.split(key, 4)

    input_size = 32
    params = init_params(k_p, input_size)

    # 1) Tiny single-tile, single-chunk batch.
    x1 = jax.random.normal(k1, (8, input_size), jnp.float32)
    out1 = jax.block_until_ready(mlp_forward(x1, params))
    _check(out1, x1, params, "small")

    # 2) Ragged multi-tile path with forced small tiles (grid + padding + even
    #    tile count exercised).
    x2 = jax.random.normal(k2, (300, input_size), jnp.float32)
    out2 = jax.block_until_ready(mlp_forward(x2, params, block_b=128, chunk=128))
    _check(out2, x2, params, "multi_tile")

    # 3) Default config exercising the in-kernel chunk loop (2 tiles x 4 chunks).
    x3 = jax.random.normal(k3, (2048, input_size), jnp.float32)
    out3 = jax.block_until_ready(mlp_forward(x3, params))
    _check(out3, x3, params, "chunked")

    print("KERNEL_OK")
</pallas_src>

<mosaic_0001>
module attributes {stable_mosaic.version = 11 : i64} {
  func.func @kernel(%arg0: i32, %arg1: memref<8x32xf32, #tpu.memory_space<vmem>>, %arg2: memref<29x32xbf16, #tpu.memory_space<vmem>>, %arg3: memref<29x1xf32, #tpu.memory_space<vmem>>, %arg4: memref<69x29xbf16, #tpu.memory_space<vmem>>, %arg5: memref<69x1xf32, #tpu.memory_space<vmem>>, %arg6: memref<75x69xbf16, #tpu.memory_space<vmem>>, %arg7: memref<75x1xf32, #tpu.memory_space<vmem>>, %arg8: memref<75x1xf32, #tpu.memory_space<vmem>>, %arg9: memref<1x1xf32, #tpu.memory_space<vmem>>, %arg10: memref<1x8xf32, #tpu.memory_space<vmem>>) attributes {dimension_semantics = [#tpu.dimension_semantics<parallel>], iteration_bounds = array<i64: 1>, scalar_prefetch = 0 : i64, scratch_operands = 0 : i64, tpu.core_type = #tpu.core_type<tc>, window_params = [{transform_indices = @transform_0, window_bounds = array<i64: 8, 32>}, {pipeline_mode = #tpu.pipeline_mode<synchronous>, transform_indices = @transform_1, window_bounds = array<i64: 29, 32>}, {pipeline_mode = #tpu.pipeline_mode<synchronous>, transform_indices = @transform_2, window_bounds = array<i64: 29, 1>}, {pipeline_mode = #tpu.pipeline_mode<synchronous>, transform_indices = @transform_3, window_bounds = array<i64: 69, 29>}, {pipeline_mode = #tpu.pipeline_mode<synchronous>, transform_indices = @transform_4, window_bounds = array<i64: 69, 1>}, {pipeline_mode = #tpu.pipeline_mode<synchronous>, transform_indices = @transform_5, window_bounds = array<i64: 75, 69>}, {pipeline_mode = #tpu.pipeline_mode<synchronous>, transform_indices = @transform_6, window_bounds = array<i64: 75, 1>}, {pipeline_mode = #tpu.pipeline_mode<synchronous>, transform_indices = @transform_7, window_bounds = array<i64: 75, 1>}, {pipeline_mode = #tpu.pipeline_mode<synchronous>, transform_indices = @transform_8, window_bounds = array<i64: 1, 1>}, {transform_indices = @transform_9, window_bounds = array<i64: 1, 8>}]} {
    %c0 = arith.constant 0 : index
    %c0_0 = arith.constant 0 : index
    %0 = vector.load %arg2[%c0, %c0_0] : memref<29x32xbf16, #tpu.memory_space<vmem>>, vector<29x32xbf16>
    %c0_1 = arith.constant 0 : index
    %c0_2 = arith.constant 0 : index
    %1 = vector.load %arg4[%c0_1, %c0_2] : memref<69x29xbf16, #tpu.memory_space<vmem>>, vector<69x29xbf16>
    %c0_3 = arith.constant 0 : index
    %c0_4 = arith.constant 0 : index
    %2 = vector.load %arg6[%c0_3, %c0_4] : memref<75x69xbf16, #tpu.memory_space<vmem>>, vector<75x69xbf16>
    %c0_5 = arith.constant 0 : index
    %c0_6 = arith.constant 0 : index
    %3 = vector.load %arg3[%c0_5, %c0_6] : memref<29x1xf32, #tpu.memory_space<vmem>>, vector<29x1xf32>
    %c0_7 = arith.constant 0 : index
    %c0_8 = arith.constant 0 : index
    %4 = vector.load %arg5[%c0_7, %c0_8] : memref<69x1xf32, #tpu.memory_space<vmem>>, vector<69x1xf32>
    %c0_9 = arith.constant 0 : index
    %c0_10 = arith.constant 0 : index
    %5 = vector.load %arg7[%c0_9, %c0_10] : memref<75x1xf32, #tpu.memory_space<vmem>>, vector<75x1xf32>
    %c0_11 = arith.constant 0 : index
    %c0_12 = arith.constant 0 : index
    %6 = vector.load %arg8[%c0_11, %c0_12] : memref<75x1xf32, #tpu.memory_space<vmem>>, vector<75x1xf32>
    %c0_13 = arith.constant 0 : index
    %c0_14 = arith.constant 0 : index
    %7 = vector.load %arg9[%c0_13, %c0_14] : memref<1x1xf32, #tpu.memory_space<vmem>>, vector<1x1xf32>
    %c0_15 = arith.constant 0 : index
    %c0_16 = arith.constant 0 : index
    %8 = vector.load %arg1[%c0_15, %c0_16] : memref<8x32xf32, #tpu.memory_space<vmem>>, vector<8x32xf32>
    %9 = arith.truncf %8 : vector<8x32xf32> to vector<8x32xbf16>
    %cst = arith.constant dense<0.000000e+00> : vector<29x8xf32>
    %10 = tpu.matmul %0, %9, %cst {dimension_numbers = #tpu.dot_dimension_numbers<[1], [1], [0], [0], [0, 0, 1, 0], [], []>} : vector<29x32xbf16>, vector<8x32xbf16>, vector<29x8xf32> -> vector<29x8xf32>
    %11 = vector.broadcast %3 : vector<29x1xf32> to vector<29x8xf32>
    %12 = arith.addf %10, %11 : vector<29x8xf32>
    %cst_17 = arith.constant 0.000000e+00 : f32
    %13 = vector.broadcast %cst_17 : f32 to vector<29x8xf32>
    %14 = arith.maximumf %12, %13 : vector<29x8xf32>
    %15 = arith.truncf %14 : vector<29x8xf32> to vector<29x8xbf16>
    %cst_18 = arith.constant dense<0.000000e+00> : vector<69x8xf32>
    %16 = tpu.matmul %1, %15, %cst_18 {dimension_numbers = #tpu.dot_dimension_numbers<[1], [0], [0], [1], [0, 0, 1, 1], [], []>} : vector<69x29xbf16>, vector<29x8xbf16>, vector<69x8xf32> -> vector<69x8xf32>
    %17 = vector.broadcast %4 : vector<69x1xf32> to vector<69x8xf32>
    %18 = arith.addf %16, %17 : vector<69x8xf32>
    %cst_19 = arith.constant 0.000000e+00 : f32
    %19 = vector.broadcast %cst_19 : f32 to vector<69x8xf32>
    %20 = arith.maximumf %18, %19 : vector<69x8xf32>
    %21 = arith.truncf %20 : vector<69x8xf32> to vector<69x8xbf16>
    %cst_20 = arith.constant dense<0.000000e+00> : vector<75x8xf32>
    %22 = tpu.matmul %2, %21, %cst_20 {dimension_numbers = #tpu.dot_dimension_numbers<[1], [0], [0], [1], [0, 0, 1, 1], [], []>} : vector<75x69xbf16>, vector<69x8xbf16>, vector<75x8xf32> -> vector<75x8xf32>
    %23 = vector.broadcast %5 : vector<75x1xf32> to vector<75x8xf32>
    %24 = arith.addf %22, %23 : vector<75x8xf32>
    %cst_21 = arith.constant 0.000000e+00 : f32
    %25 = vector.broadcast %cst_21 : f32 to vector<75x8xf32>
    %26 = arith.maximumf %24, %25 : vector<75x8xf32>
    %27 = vector.broadcast %6 : vector<75x1xf32> to vector<75x8xf32>
    %28 = arith.mulf %26, %27 : vector<75x8xf32>
    %cst_22 = arith.constant dense<0.000000e+00> : vector<8xf32>
    %29 = vector.multi_reduction <add>, %28, %cst_22 [0] : vector<75x8xf32> to vector<8xf32>
    %30 = vector.shape_cast %29 : vector<8xf32> to vector<1x8xf32>
    %31 = vector.broadcast %7 : vector<1x1xf32> to vector<1x8xf32>
    %32 = arith.addf %30, %31 : vector<1x8xf32>
    %c0_23 = arith.constant 0 : index
    %c0_24 = arith.constant 0 : index
    %33 = vector.load %arg10[%c0_23, %c0_24] : memref<1x8xf32, #tpu.memory_space<vmem>>, vector<1x8xf32>
    tpu.vector_store %arg10[%c0_23, %c0_24], %32 {strides = array<i32>} : memref<1x8xf32, #tpu.memory_space<vmem>>, vector<1x8xf32>,
    return
  }
  func.func @transform_0(%arg0: i32) -> (i32, i32) {
    %c0_i32 = arith.constant 0 : i32
    %c0_i32_0 = arith.constant 0 : i32
    return %arg0, %c0_i32 : i32, i32
  }
  func.func @transform_1(%arg0: i32) -> (i32, i32) {
    %c0_i32 = arith.constant 0 : i32
    %c0_i32_0 = arith.constant 0 : i32
    %c0_i32_1 = arith.constant 0 : i32
    return %c0_i32, %c0_i32_0 : i32, i32
  }
  func.func @transform_2(%arg0: i32) -> (i32, i32) {
    %c0_i32 = arith.constant 0 : i32
    %c0_i32_0 = arith.constant 0 : i32
    %c0_i32_1 = arith.constant 0 : i32
    return %c0_i32, %c0_i32_0 : i32, i32
  }
  func.func @transform_3(%arg0: i32) -> (i32, i32) {
    %c0_i32 = arith.constant 0 : i32
    %c0_i32_0 = arith.constant 0 : i32
    %c0_i32_1 = arith.constant 0 : i32
    return %c0_i32, %c0_i32_0 : i32, i32
  }
  func.func @transform_4(%arg0: i32) -> (i32, i32) {
    %c0_i32 = arith.constant 0 : i32
    %c0_i32_0 = arith.constant 0 : i32
    %c0_i32_1 = arith.constant 0 : i32
    return %c0_i32, %c0_i32_0 : i32, i32
  }
  func.func @transform_5(%arg0: i32) -> (i32, i32) {
    %c0_i32 = arith.constant 0 : i32
    %c0_i32_0 = arith.constant 0 : i32
    %c0_i32_1 = arith.constant 0 : i32
    return %c0_i32, %c0_i32_0 : i32, i32
  }
  func.func @transform_6(%arg0: i32) -> (i32, i32) {
    %c0_i32 = arith.constant 0 : i32
    %c0_i32_0 = arith.constant 0 : i32
    %c0_i32_1 = arith.constant 0 : i32
    return %c0_i32, %c0_i32_0 : i32, i32
  }
  func.func @transform_7(%arg0: i32) -> (i32, i32) {
    %c0_i32 = arith.constant 0 : i32
    %c0_i32_0 = arith.constant 0 : i32
    %c0_i32_1 = arith.constant 0 : i32
    return %c0_i32, %c0_i32_0 : i32, i32
  }
  func.func @transform_8(%arg0: i32) -> (i32, i32) {
    %c0_i32 = arith.constant 0 : i32
    %c0_i32_0 = arith.constant 0 : i32
    %c0_i32_1 = arith.constant 0 : i32
    return %c0_i32, %c0_i32_0 : i32, i32
  }
  func.func @transform_9(%arg0: i32) -> (i32, i32) {
    %c0_i32 = arith.constant 0 : i32
    %c0_i32_0 = arith.constant 0 : i32
    return %c0_i32, %arg0 : i32, i32
  }
}

</mosaic_0001>

<llo_original>
// kernel: tpu_custom_call.1
$region0: #{tpu_custom_call.1}
  #allocation0 [shape = 'u32[]', space=smem, size = 0x4, offset = 0x4, fixed_abs, tag = 'smem constant byte address 0x4 - core index']
  #allocation1 [shape = 'u32[144,128]{1,0:T(1,128)}', space=vmem, size = 0x12000, scoped, tag = 'internal scratch']
  #allocation2 [shape = 'f32[1,1]{1,0:T(1,128)S(1)}', space=vmem, size = 0x200, scoped, tag = 'scoped memory for tpu_custom_call.1']
  %s0 = inlined_call_operand.vmem [shape: f32[8,32], index: 0, kind: input, shape index: {}]
  %s1 = inlined_call_operand.vmem [shape: bf16[29,32], index: 1, kind: input, shape index: {}]
  %s2 = inlined_call_operand.vmem [shape: f32[29,1], index: 2, kind: input, shape index: {}]
  %s3 = inlined_call_operand.vmem [shape: bf16[69,29], index: 3, kind: input, shape index: {}]
  %s4 = inlined_call_operand.vmem [shape: f32[69,1], index: 4, kind: input, shape index: {}]
  %s5 = inlined_call_operand.vmem [shape: bf16[75,69], index: 5, kind: input, shape index: {}]
  %s6 = inlined_call_operand.vmem [shape: f32[75,1], index: 6, kind: input, shape index: {}]
  %s7 = inlined_call_operand.vmem [shape: f32[75,1], index: 7, kind: input, shape index: {}]
  %s8 = inlined_call_operand.<no memory space> [shape: f32[1,1], index: 8, kind: input, shape index: {}]
  %s9 = inlined_call_operand.hbm [shape: f32[1,8], index: 9, kind: output, shape index: {}]
  %s10 = sld [smem:[#allocation0]]
  $region46: #{tpu_custom_call.1} parent=0
    _
  %s12 = ssub.s32 1, %s10
  %s13 = scalar_select 0, %s12, %s10
  %v14 = vstv %s8
  %15 = vst [vmem:[#allocation2] sm:$0x1] %v14
  $region1: #{tpu_custom_call.1} parent=0
    #allocation3 [shape = 'u8[512]{0}', space=vmem, size = 0x400, scoped, tag = 'output window, operand 0, single buffered']
    #allocation4 [shape = 's32[1]{0}', space=sflag, size = 0x4, scoped, tag = 'scoped memory for tpu_custom_call.1']
    %16 = vsyncpa [#allocation4], 0
    // Predicated region
    $region2: #{tpu_custom_call.1} parent=1 // pred_check
      _
    $region3: #{tpu_custom_call.1} parent=1 // pred_check_branch
      %18 = sbr.rel (0) target = $region5
    $region4: #{tpu_custom_call.1} parent=1 // pred_region
      _
    $region5: #{tpu_custom_call.1} parent=1 // pred_fallthru
      _
    // Predicated region
    $region6: #{tpu_custom_call.1} parent=1 // pred_check
      _
    $region7: #{tpu_custom_call.1} parent=1 // pred_check_branch
      %20 = sbr.rel (0) target = $region9
    $region8: #{tpu_custom_call.1} parent=1 // pred_region
      _
    $region9: #{tpu_custom_call.1} parent=1 // pred_fallthru
      _
    // Predicated region
    $region10: #{tpu_custom_call.1} parent=1 // pred_check
      _
    $region11: #{tpu_custom_call.1} parent=1 // pred_check_branch
      %22 = sbr.rel (0) target = $region13
    $region12: #{tpu_custom_call.1} parent=1 // pred_region
      _
    $region13: #{tpu_custom_call.1} parent=1 // pred_fallthru
      _
    // Predicated region
    $region14: #{tpu_custom_call.1} parent=1 // pred_check
      _
    $region15: #{tpu_custom_call.1} parent=1 // pred_check_branch
      %24 = sbr.rel (0) target = $region17
    $region16: #{tpu_custom_call.1} parent=1 // pred_region
      _
    $region17: #{tpu_custom_call.1} parent=1 // pred_fallthru
      _
    // Predicated region
    $region18: #{tpu_custom_call.1} parent=1 // pred_check
      _
    $region19: #{tpu_custom_call.1} parent=1 // pred_check_branch
      %26 = sbr.rel (0) target = $region21
    $region20: #{tpu_custom_call.1} parent=1 // pred_region
      _
    $region21: #{tpu_custom_call.1} parent=1 // pred_fallthru
      _
    // Predicated region
    $region22: #{tpu_custom_call.1} parent=1 // pred_check
      _
    $region23: #{tpu_custom_call.1} parent=1 // pred_check_branch
      %28 = sbr.rel (0) target = $region25
    $region24: #{tpu_custom_call.1} parent=1 // pred_region
      _
    $region25: #{tpu_custom_call.1} parent=1 // pred_fallthru
      _
    // Predicated region
    $region26: #{tpu_custom_call.1} parent=1 // pred_check
      _
    $region27: #{tpu_custom_call.1} parent=1 // pred_check_branch
      %30 = sbr.rel (0) target = $region29
    $region28: #{tpu_custom_call.1} parent=1 // pred_region
      _
    $region29: #{tpu_custom_call.1} parent=1 // pred_fallthru
      _
    // Predicated region
    $region30: #{tpu_custom_call.1} parent=1 // pred_check
      _
    $region31: #{tpu_custom_call.1} parent=1 // pred_check_branch
      %32 = sbr.rel (0) target = $region33
    $region32: #{tpu_custom_call.1} parent=1 // pred_region
      _
    $region33: #{tpu_custom_call.1} parent=1 // pred_fallthru
      _
    // Predicated region
    $region34: #{tpu_custom_call.1} parent=1 // pred_check
      _
    $region35: #{tpu_custom_call.1} parent=1 // pred_check_branch
      %34 = sbr.rel (0) target = $region37
    $region36: #{tpu_custom_call.1} parent=1 // pred_region
      _
    $region37: #{tpu_custom_call.1} parent=1 // pred_fallthru
      _
    %v36 = vld [vmem:[%s1] sm:$0xf]
    %v37 = vld [vmem:[%s1 + $0x4] sm:$0xf]
    %v38 = vld [vmem:[%s1 + $0x8] sm:$0xf]
    %v39 = vld [vmem:[%s1 + $0xc] sm:$0x7]
    %v40 = vld [vmem:[%s3] sm:$0xf]
    %v41 = vld [vmem:[%s3 + $0x4] sm:$0xf]
    %v42 = vld [vmem:[%s3 + $0x8] sm:$0xf]
    %v43 = vld [vmem:[%s3 + $0xc] sm:$0xf]
    %v44 = vld [vmem:[%s3 + $0x10] sm:$0xf]
    %v45 = vld [vmem:[%s3 + $0x14] sm:$0xf]
    %v46 = vld [vmem:[%s3 + $0x18] sm:$0xf]
    %v47 = vld [vmem:[%s3 + $0x1c] sm:$0xf]
    %v48 = vld [vmem:[%s3 + $0x20] sm:$0x7]
    %v49 = vld [vmem:[%s5] sm:$0xf]
    %v50 = vld [vmem:[%s5 + $0x4] sm:$0xf]
    %v51 = vld [vmem:[%s5 + $0x8] sm:$0xf]
    %v52 = vld [vmem:[%s5 + $0xc] sm:$0xf]
    %v53 = vld [vmem:[%s5 + $0x10] sm:$0xf]
    %v54 = vld [vmem:[%s5 + $0x14] sm:$0xf]
    %v55 = vld [vmem:[%s5 + $0x18] sm:$0xf]
    %v56 = vld [vmem:[%s5 + $0x1c] sm:$0xf]
    %v57 = vld [vmem:[%s5 + $0x20] sm:$0xf]
    %v58 = vld [vmem:[%s5 + $0x24] sm:$0x3]
    %v59 = vld [vmem:[%s2] sm:$0xff]
    %v60 = vld [vmem:[%s2 + $0x8] sm:$0xff]
    %v61 = vld [vmem:[%s2 + $0x10] sm:$0xff]
    %v62 = vld [vmem:[%s2 + $0x18] sm:$0x1f]
    %v63 = vld [vmem:[%s4] sm:$0xff]
    %v64 = vld [vmem:[%s4 + $0x8] sm:$0xff]
    %v65 = vld [vmem:[%s4 + $0x10] sm:$0xff]
    %v66 = vld [vmem:[%s4 + $0x18] sm:$0xff]
    %v67 = vld [vmem:[%s4 + $0x20] sm:$0xff]
    %v68 = vld [vmem:[%s4 + $0x28] sm:$0xff]
    %v69 = vld [vmem:[%s4 + $0x30] sm:$0xff]
    %v70 = vld [vmem:[%s4 + $0x38] sm:$0xff]
    %v71 = vld [vmem:[%s4 + $0x40] sm:$0x1f]
    %v72 = vld [vmem:[%s6] sm:$0xff]
    %v73 = vld [vmem:[%s6 + $0x8] sm:$0xff]
    %v74 = vld [vmem:[%s6 + $0x10] sm:$0xff]
    %v75 = vld [vmem:[%s6 + $0x18] sm:$0xff]
    %v76 = vld [vmem:[%s6 + $0x20] sm:$0xff]
    %v77 = vld [vmem:[%s6 + $0x28] sm:$0xff]
    %v78 = vld [vmem:[%s6 + $0x30] sm:$0xff]
    %v79 = vld [vmem:[%s6 + $0x38] sm:$0xff]
    %v80 = vld [vmem:[%s6 + $0x40] sm:$0xff]
    %v81 = vld [vmem:[%s6 + $0x48] sm:$0x7]
    %v82 = vld [vmem:[%s7] sm:$0xff]
    %v83 = vld [vmem:[%s7 + $0x8] sm:$0xff]
    %v84 = vld [vmem:[%s7 + $0x10] sm:$0xff]
    %v85 = vld [vmem:[%s7 + $0x18] sm:$0xff]
    %v86 = vld [vmem:[%s7 + $0x20] sm:$0xff]
    %v87 = vld [vmem:[%s7 + $0x28] sm:$0xff]
    %v88 = vld [vmem:[%s7 + $0x30] sm:$0xff]
    %v89 = vld [vmem:[%s7 + $0x38] sm:$0xff]
    %v90 = vld [vmem:[%s7 + $0x40] sm:$0xff]
    %v91 = vld [vmem:[%s7 + $0x48] sm:$0x7]
    %v92 = vld [vmem:[#allocation2] sm:$0x1]
    %v93 = vld [vmem:[%s0] sm:$0xff]
    %v94 = vpack.c.bf16 %v93, %v93
    %96 = vset.pattern.permute.xlu0 0
    %97 = vperm.xlu0 %96, %v59
    %v98 = vpop.permute.xlu0 %97
    %101 = vset.pattern.permute.xlu0 0
    %102 = vperm.xlu0 %101, %v60
    %v103 = vpop.permute.xlu0 %102
    %106 = vset.pattern.permute.xlu0 0
    %107 = vperm.xlu0 %106, %v61
    %v108 = vpop.permute.xlu0 %107
    %111 = vset.pattern.permute.xlu0 0
    %112 = vperm.xlu0 %111, %v62
    %v113 = vpop.permute.xlu0 %112
    %v119 = vunpack.c.l.b16 %v36
    %v120 = vunpack.c.l.b16 %v37
    %v121 = vunpack.c.l.b16 %v38
    %v122 = vunpack.c.l.b16 %v39
    %v123 = vpack.c.b16 %v120, %v119
    %v124 = vpack.c.b16 %v122, %v121
    %vm125 = vcmask 261120
    %v127 = vsel %vm125, %v123, 0
    %v130 = vsel %vm125, %v124, 0
    %v133 = vsel %vm125, %v94, 0
    %135 = vmatprep.subr.bf16.mxu0 0
    %136 = vmatpush1.bf16.xpose.msra.mxu0 %v133
    %137 = vmatprep.subr.bf16.mxu0 0
    %138 = vmatpush1.bf16.xpose.msra.mxu0 0
    %139 = vmatprep.subr.bf16.mxu0 0
    %140 = vmatpush1.bf16.xpose.msra.mxu0 0
    %141 = vmatprep.subr.bf16.mxu0 0
    %142 = vmatpush1.bf16.xpose.msra.mxu0 0
    %143 = vmatprep.subr.bf16.mxu0 0
    %144 = vmatpush1.bf16.xpose.msra.mxu0 0
    %145 = vmatprep.subr.bf16.mxu0 0
    %146 = vmatpush1.bf16.xpose.msra.mxu0 0
    %147 = vmatprep.subr.bf16.mxu0 0
    %148 = vmatpush1.bf16.xpose.msra.mxu0 0
    %149 = vmatprep.subr.bf16.mxu0 0
    %150 = vmatpush1.bf16.xpose.msra.mxu0 0
    %151 = vmatprep.subr.bf16.mxu0 0
    %152 = vmatpush1.bf16.xpose.msra.mxu0 0
    %153 = vmatprep.subr.bf16.mxu0 0
    %154 = vmatpush1.bf16.xpose.msra.mxu0 0
    %155 = vmatprep.subr.bf16.mxu0 0
    %156 = vmatpush1.bf16.xpose.msra.mxu0 0
    %157 = vmatprep.subr.bf16.mxu0 0
    %158 = vmatpush1.bf16.xpose.msra.mxu0 0
    %159 = vmatprep.subr.bf16.mxu0 0
    %160 = vmatpush1.bf16.xpose.msra.mxu0 0
    %161 = vmatprep.subr.bf16.mxu0 0
    %162 = vmatpush1.bf16.xpose.msra.mxu0 0
    %163 = vmatprep.subr.bf16.mxu0 0
    %164 = vmatpush1.bf16.xpose.msra.mxu0 0
    %165 = vmatprep.subr.bf16.mxu0 0
    %166 = vmatpush1.bf16.xpose.msra.mxu0 0
    %167 = vmatprep.mubr.bf16.mxu0 0
    %168 = vmatmul.mubr.bf16.gmra.mrb[0].mxu0 %v127
    %v169 = vpop.f32.mrb[0].mxu0
    %v170 = vadd.f32 %v98, %v169
    %v171 = vpop.f32.mrb[0].mxu0
    %v172 = vpop.f32.mrb[0].mxu0
    %v173 = vadd.f32 %v103, %v172
    %v174 = vpop.f32.mrb[0].mxu0
    %175 = vmatprep.mubr.bf16.mxu0 0
    %176 = vmatmul.mubr.bf16.gmra.mrb[0].mxu0 %v130
    %v177 = vpop.f32.mrb[0].mxu0
    %v178 = vadd.f32 %v108, %v177
    %v179 = vpop.f32.mrb[0].mxu0
    %v180 = vpop.f32.mrb[0].mxu0
    %v181 = vadd.f32 %v113, %v180
    %v182 = vpop.f32.mrb[0].mxu0
    %183 = vdwg.mxu0
    %v184 = vmax.f32 %v170, 0.0
    %v185 = vmax.f32 %v173, 0.0
    %v186 = vmax.f32 %v178, 0.0
    %v187 = vmax.f32 %v181, 0.0
    %v188 = vpack.c.bf16 %v185, %v184
    %v189 = vpack.c.bf16 %v187, %v186
    %191 = vset.pattern.permute.xlu0 0
    %192 = vperm.xlu0 %191, %v63
    %v193 = vpop.permute.xlu0 %192
    %196 = vset.pattern.permute.xlu0 0
    %197 = vperm.xlu0 %196, %v64
    %v198 = vpop.permute.xlu0 %197
    %201 = vset.pattern.permute.xlu0 0
    %202 = vperm.xlu0 %201, %v65
    %v203 = vpop.permute.xlu0 %202
    %206 = vset.pattern.permute.xlu0 0
    %207 = vperm.xlu0 %206, %v66
    %v208 = vpop.permute.xlu0 %207
    %211 = vset.pattern.permute.xlu0 0
    %212 = vperm.xlu0 %211, %v67
    %v213 = vpop.permute.xlu0 %212
    %216 = vset.pattern.permute.xlu0 0
    %217 = vperm.xlu0 %216, %v68
    %v218 = vpop.permute.xlu0 %217
    %221 = vset.pattern.permute.xlu0 0
    %222 = vperm.xlu0 %221, %v69
    %v223 = vpop.permute.xlu0 %222
    %226 = vset.pattern.permute.xlu0 0
    %227 = vperm.xlu0 %226, %v70
    %v228 = vpop.permute.xlu0 %227
    %231 = vset.pattern.permute.xlu0 0
    %232 = vperm.xlu0 %231, %v71
    %v233 = vpop.permute.xlu0 %232
    %v244 = vunpack.c.l.b16 %v40
    %v245 = vunpack.c.l.b16 %v41
    %v246 = vunpack.c.l.b16 %v42
    %v247 = vunpack.c.l.b16 %v43
    %v248 = vunpack.c.l.b16 %v44
    %v249 = vunpack.c.l.b16 %v45
    %v250 = vunpack.c.l.b16 %v46
    %v251 = vunpack.c.l.b16 %v47
    %v252 = vunpack.c.l.b16 %v48
    %v253 = vpack.c.b16 %v245, %v244
    %v254 = vpack.c.b16 %v247, %v246
    %v255 = vpack.c.b16 %v249, %v248
    %v256 = vpack.c.b16 %v251, %v250
    %v257 = vpack.c.b16 %v252, %v252
    %vm258 = vcmask 236544
    %v260 = vsel %vm258, %v253, 0
    %v263 = vsel %vm258, %v254, 0
    %v266 = vsel %vm258, %v255, 0
    %v269 = vsel %vm258, %v256, 0
    %v272 = vsel %vm258, %v257, 0
    %vm274 = vcmask 1045504
    %vm275 = vcmask 1046528
    %v276 = vsel %vm274, 4294967295, 65535
    %v277 = vsel %vm275, %v276, 0
    %v279 = vand.u32 %v189, %v277
    %281 = vmatprep.subr.bf16.mxu0 0
    %282 = vmatpush1.bf16.msra.mxu0 %v188
    %283 = vmatprep.subr.bf16.mxu0 0
    %284 = vmatpush1.bf16.msra.mxu0 %v279
    %285 = vmatprep.subr.bf16.mxu0 0
    %286 = vmatpush1.bf16.msra.mxu0 0
    %287 = vmatprep.subr.bf16.mxu0 0
    %288 = vmatpush1.bf16.msra.mxu0 0
    %289 = vmatprep.subr.bf16.mxu0 0
    %290 = vmatpush1.bf16.msra.mxu0 0
    %291 = vmatprep.subr.bf16.mxu0 0
    %292 = vmatpush1.bf16.msra.mxu0 0
    %293 = vmatprep.subr.bf16.mxu0 0
    %294 = vmatpush1.bf16.msra.mxu0 0
    %295 = vmatprep.subr.bf16.mxu0 0
    %296 = vmatpush1.bf16.msra.mxu0 0
    %297 = vmatprep.subr.bf16.mxu0 0
    %298 = vmatpush1.bf16.msra.mxu0 0
    %299 = vmatprep.subr.bf16.mxu0 0
    %300 = vmatpush1.bf16.msra.mxu0 0
    %301 = vmatprep.subr.bf16.mxu0 0
    %302 = vmatpush1.bf16.msra.mxu0 0
    %303 = vmatprep.subr.bf16.mxu0 0
    %304 = vmatpush1.bf16.msra.mxu0 0
    %305 = vmatprep.subr.bf16.mxu0 0
    %306 = vmatpush1.bf16.msra.mxu0 0
    %307 = vmatprep.subr.bf16.mxu0 0
    %308 = vmatpush1.bf16.msra.mxu0 0
    %309 = vmatprep.subr.bf16.mxu0 0
    %310 = vmatpush1.bf16.msra.mxu0 0
    %311 = vmatprep.subr.bf16.mxu0 0
    %312 = vmatpush1.bf16.msra.mxu0 0
    %313 = vmatprep.mubr.bf16.mxu0 0
    %314 = vmatmul.mubr.bf16.gmra.mrb[0].mxu0 %v260
    %v315 = vpop.f32.mrb[0].mxu0
    %v316 = vadd.f32 %v193, %v315
    %v317 = vpop.f32.mrb[0].mxu0
    %v318 = vpop.f32.mrb[0].mxu0
    %v319 = vadd.f32 %v198, %v318
    %v320 = vpop.f32.mrb[0].mxu0
    %321 = vmatprep.mubr.bf16.mxu0 0
    %322 = vmatmul.mubr.bf16.gmra.mrb[0].mxu0 %v263
    %v323 = vpop.f32.mrb[0].mxu0
    %v324 = vadd.f32 %v203, %v323
    %v325 = vpop.f32.mrb[0].mxu0
    %v326 = vpop.f32.mrb[0].mxu0
    %v327 = vadd.f32 %v208, %v326
    %v328 = vpop.f32.mrb[0].mxu0
    %329 = vmatprep.mubr.bf16.mxu0 0
    %330 = vmatmul.mubr.bf16.gmra.mrb[0].mxu0 %v266
    %v331 = vpop.f32.mrb[0].mxu0
    %v332 = vadd.f32 %v213, %v331
    %v333 = vpop.f32.mrb[0].mxu0
    %v334 = vpop.f32.mrb[0].mxu0
    %v335 = vadd.f32 %v218, %v334
    %v336 = vpop.f32.mrb[0].mxu0
    %337 = vmatprep.mubr.bf16.mxu0 0
    %338 = vmatmul.mubr.bf16.gmra.mrb[0].mxu0 %v269
    %v339 = vpop.f32.mrb[0].mxu0
    %v340 = vadd.f32 %v223, %v339
    %v341 = vpop.f32.mrb[0].mxu0
    %v342 = vpop.f32.mrb[0].mxu0
    %v343 = vadd.f32 %v228, %v342
    %v344 = vpop.f32.mrb[0].mxu0
    %345 = vmatprep.mubr.bf16.mxu0 0
    %346 = vmatmul.mubr.bf16.gmra.mrb[0].mxu0 %v272
    %v347 = vpop.f32.mrb[0].mxu0
    %v348 = vadd.f32 %v233, %v347
    %v349 = vpop.f32.mrb[0].mxu0
    %v350 = vpop.f32.mrb[0].mxu0
    %v351 = vpop.f32.mrb[0].mxu0
    %352 = vdwg.mxu0
    %v353 = vmax.f32 %v316, 0.0
    %v354 = vmax.f32 %v319, 0.0
    %v355 = vmax.f32 %v324, 0.0
    %v356 = vmax.f32 %v327, 0.0
    %v357 = vmax.f32 %v332, 0.0
    %v358 = vmax.f32 %v335, 0.0
    %v359 = vmax.f32 %v340, 0.0
    %v360 = vmax.f32 %v343, 0.0
    %v361 = vmax.f32 %v348, 0.0
    %v362 = vpack.c.bf16 %v354, %v353
    %v363 = vpack.c.bf16 %v356, %v355
    %v364 = vpack.c.bf16 %v358, %v357
    %v365 = vpack.c.bf16 %v360, %v359
    %v366 = vpack.c.bf16 %v361, %v361
    %368 = vset.pattern.permute.xlu0 0
    %369 = vperm.xlu0 %368, %v72
    %v370 = vpop.permute.xlu0 %369
    %373 = vset.pattern.permute.xlu0 0
    %374 = vperm.xlu0 %373, %v73
    %v375 = vpop.permute.xlu0 %374
    %378 = vset.pattern.permute.xlu0 0
    %379 = vperm.xlu0 %378, %v74
    %v380 = vpop.permute.xlu0 %379
    %383 = vset.pattern.permute.xlu0 0
    %384 = vperm.xlu0 %383, %v75
    %v385 = vpop.permute.xlu0 %384
    %388 = vset.pattern.permute.xlu0 0
    %389 = vperm.xlu0 %388, %v76
    %v390 = vpop.permute.xlu0 %389
    %393 = vset.pattern.permute.xlu0 0
    %394 = vperm.xlu0 %393, %v77
    %v395 = vpop.permute.xlu0 %394
    %398 = vset.pattern.permute.xlu0 0
    %399 = vperm.xlu0 %398, %v78
    %v400 = vpop.permute.xlu0 %399
    %403 = vset.pattern.permute.xlu0 0
    %404 = vperm.xlu0 %403, %v79
    %v405 = vpop.permute.xlu0 %404
    %408 = vset.pattern.permute.xlu0 0
    %409 = vperm.xlu0 %408, %v80
    %v410 = vpop.permute.xlu0 %409
    %413 = vset.pattern.permute.xlu0 0
    %414 = vperm.xlu0 %413, %v81
    %v415 = vpop.permute.xlu0 %414
    %v427 = vunpack.c.l.b16 %v49
    %v428 = vunpack.c.l.b16 %v50
    %v429 = vunpack.c.l.b16 %v51
    %v430 = vunpack.c.l.b16 %v52
    %v431 = vunpack.c.l.b16 %v53
    %v432 = vunpack.c.l.b16 %v54
    %v433 = vunpack.c.l.b16 %v55
    %v434 = vunpack.c.l.b16 %v56
    %v435 = vunpack.c.l.b16 %v57
    %v436 = vunpack.c.l.b16 %v58
    %v437 = vpack.c.b16 %v428, %v427
    %v438 = vpack.c.b16 %v430, %v429
    %v439 = vpack.c.b16 %v432, %v431
    %v440 = vpack.c.b16 %v434, %v433
    %v441 = vpack.c.b16 %v436, %v435
    %vm442 = vcmask 564224
    %v444 = vsel %vm442, %v437, 0
    %v447 = vsel %vm442, %v438, 0
    %v450 = vsel %vm442, %v439, 0
    %v453 = vsel %vm442, %v440, 0
    %v456 = vsel %vm442, %v441, 0
    %vm458 = vcmask 1041408
    %vm459 = vcmask 1042432
    %v460 = vsel %vm458, 4294967295, 65535
    %v461 = vsel %vm459, %v460, 0
    %v463 = vand.u32 %v366, %v461
    %465 = vmatprep.subr.bf16.mxu0 0
    %466 = vmatpush1.bf16.msra.mxu0 %v362
    %467 = vmatprep.subr.bf16.mxu0 0
    %468 = vmatpush1.bf16.msra.mxu0 %v363
    %469 = vmatprep.subr.bf16.mxu0 0
    %470 = vmatpush1.bf16.msra.mxu0 %v364
    %471 = vmatprep.subr.bf16.mxu0 0
    %472 = vmatpush1.bf16.msra.mxu0 %v365
    %473 = vmatprep.subr.bf16.mxu0 0
    %474 = vmatpush1.bf16.msra.mxu0 %v463
    %475 = vmatprep.subr.bf16.mxu0 0
    %476 = vmatpush1.bf16.msra.mxu0 0
    %477 = vmatprep.subr.bf16.mxu0 0
    %478 = vmatpush1.bf16.msra.mxu0 0
    %479 = vmatprep.subr.bf16.mxu0 0
    %480 = vmatpush1.bf16.msra.mxu0 0
    %481 = vmatprep.subr.bf16.mxu0 0
    %482 = vmatpush1.bf16.msra.mxu0 0
    %483 = vmatprep.subr.bf16.mxu0 0
    %484 = vmatpush1.bf16.msra.mxu0 0
    %485 = vmatprep.subr.bf16.mxu0 0
    %486 = vmatpush1.bf16.msra.mxu0 0
    %487 = vmatprep.subr.bf16.mxu0 0
    %488 = vmatpush1.bf16.msra.mxu0 0
    %489 = vmatprep.subr.bf16.mxu0 0
    %490 = vmatpush1.bf16.msra.mxu0 0
    %491 = vmatprep.subr.bf16.mxu0 0
    %492 = vmatpush1.bf16.msra.mxu0 0
    %493 = vmatprep.subr.bf16.mxu0 0
    %494 = vmatpush1.bf16.msra.mxu0 0
    %495 = vmatprep.subr.bf16.mxu0 0
    %496 = vmatpush1.bf16.msra.mxu0 0
    %497 = vmatprep.mubr.bf16.mxu0 0
    %498 = vmatmul.mubr.bf16.gmra.mrb[0].mxu0 %v444
    %v499 = vpop.f32.mrb[0].mxu0
    %v500 = vadd.f32 %v370, %v499
    %v501 = vpop.f32.mrb[0].mxu0
    %v502 = vpop.f32.mrb[0].mxu0
    %v503 = vadd.f32 %v375, %v502
    %v504 = vpop.f32.mrb[0].mxu0
    %505 = vmatprep.mubr.bf16.mxu0 0
    %506 = vmatmul.mubr.bf16.gmra.mrb[0].mxu0 %v447
    %v507 = vpop.f32.mrb[0].mxu0
    %v508 = vadd.f32 %v380, %v507
    %v509 = vpop.f32.mrb[0].mxu0
    %v510 = vpop.f32.mrb[0].mxu0
    %v511 = vadd.f32 %v385, %v510
    %v512 = vpop.f32.mrb[0].mxu0
    %513 = vmatprep.mubr.bf16.mxu0 0
    %514 = vmatmul.mubr.bf16.gmra.mrb[0].mxu0 %v450
    %v515 = vpop.f32.mrb[0].mxu0
    %v516 = vadd.f32 %v390, %v515
    %v517 = vpop.f32.mrb[0].mxu0
    %v518 = vpop.f32.mrb[0].mxu0
    %v519 = vadd.f32 %v395, %v518
    %v520 = vpop.f32.mrb[0].mxu0
    %521 = vmatprep.mubr.bf16.mxu0 0
    %522 = vmatmul.mubr.bf16.gmra.mrb[0].mxu0 %v453
    %v523 = vpop.f32.mrb[0].mxu0
    %v524 = vadd.f32 %v400, %v523
    %v525 = vpop.f32.mrb[0].mxu0
    %v526 = vpop.f32.mrb[0].mxu0
    %v527 = vadd.f32 %v405, %v526
    %v528 = vpop.f32.mrb[0].mxu0
    %529 = vmatprep.mubr.bf16.mxu0 0
    %530 = vmatmul.mubr.bf16.gmra.mrb[0].mxu0 %v456
    %v531 = vpop.f32.mrb[0].mxu0
    %v532 = vadd.f32 %v410, %v531
    %v533 = vpop.f32.mrb[0].mxu0
    %v534 = vpop.f32.mrb[0].mxu0
    %v535 = vadd.f32 %v415, %v534
    %v536 = vpop.f32.mrb[0].mxu0
    %537 = vdwg.mxu0
    %v538 = vmax.f32 %v500, 0.0
    %v539 = vmax.f32 %v503, 0.0
    %v540 = vmax.f32 %v508, 0.0
    %v541 = vmax.f32 %v511, 0.0
    %v542 = vmax.f32 %v516, 0.0
    %v543 = vmax.f32 %v519, 0.0
    %v544 = vmax.f32 %v524, 0.0
    %v545 = vmax.f32 %v527, 0.0
    %v546 = vmax.f32 %v532, 0.0
    %v547 = vmax.f32 %v535, 0.0
    %549 = vset.pattern.permute.xlu0 0
    %550 = vperm.xlu0 %549, %v82
    %v551 = vpop.permute.xlu0 %550
    %554 = vset.pattern.permute.xlu0 0
    %555 = vperm.xlu0 %554, %v83
    %v556 = vpop.permute.xlu0 %555
    %559 = vset.pattern.permute.xlu0 0
    %560 = vperm.xlu0 %559, %v84
    %v561 = vpop.permute.xlu0 %560
    %564 = vset.pattern.permute.xlu0 0
    %565 = vperm.xlu0 %564, %v85
    %v566 = vpop.permute.xlu0 %565
    %569 = vset.pattern.permute.xlu0 0
    %570 = vperm.xlu0 %569, %v86
    %v571 = vpop.permute.xlu0 %570
    %574 = vset.pattern.permute.xlu0 0
    %575 = vperm.xlu0 %574, %v87
    %v576 = vpop.permute.xlu0 %575
    %579 = vset.pattern.permute.xlu0 0
    %580 = vperm.xlu0 %579, %v88
    %v581 = vpop.permute.xlu0 %580
    %584 = vset.pattern.permute.xlu0 0
    %585 = vperm.xlu0 %584, %v89
    %v586 = vpop.permute.xlu0 %585
    %589 = vset.pattern.permute.xlu0 0
    %590 = vperm.xlu0 %589, %v90
    %v591 = vpop.permute.xlu0 %590
    %594 = vset.pattern.permute.xlu0 0
    %595 = vperm.xlu0 %594, %v91
    %v596 = vpop.permute.xlu0 %595
    %v598 = vmul.f32 %v538, %v551
    %v599 = vmul.f32 %v539, %v556
    %v600 = vmul.f32 %v540, %v561
    %v601 = vmul.f32 %v541, %v566
    %v602 = vmul.f32 %v542, %v571
    %v603 = vmul.f32 %v543, %v576
    %v604 = vmul.f32 %v544, %v581
    %v605 = vmul.f32 %v545, %v586
    %v606 = vmul.f32 %v546, %v591
    %v607 = vmul.f32 %v547, %v596
    %vm608 = vcmask 64512
    %v609 = vsel %vm608, %v598, 0.0
    %v610 = vsel %vm608, %v599, 0.0
    %v611 = vadd.f32 %v609, %v610
    %v612 = vsel %vm608, %v600, 0.0
    %v613 = vadd.f32 %v611, %v612
    %v614 = vsel %vm608, %v601, 0.0
    %v615 = vadd.f32 %v613, %v614
    %v616 = vsel %vm608, %v602, 0.0
    %v617 = vadd.f32 %v615, %v616
    %v618 = vsel %vm608, %v603, 0.0
    %v619 = vadd.f32 %v617, %v618
    %v620 = vsel %vm608, %v604, 0.0
    %v621 = vadd.f32 %v619, %v620
    %v622 = vsel %vm608, %v605, 0.0
    %v623 = vadd.f32 %v621, %v622
    %v624 = vsel %vm608, %v606, 0.0
    %v625 = vadd.f32 %v623, %v624
    %vm626 = vcmask 59392
    %v627 = vsel %vm626, %v607, 0.0
    %v628 = vadd.f32 %v625, %v627
    %v629 = vrot.slane %v628, 4
    %v630 = vadd.f32 %v628, %v629
    %v631 = vrot.slane %v630, 2
    %v632 = vadd.f32 %v630, %v631
    %v633 = vrot.slane %v632, 1
    %v634 = vadd.f32 %v632, %v633
    %636 = vset.pattern.permute.xlu0 0
    %637 = vperm.xlu0 %636, %v92
    %v638 = vpop.permute.xlu0 %637
    %v640 = vlaneseq
    %v641 = vshrl.u32 %v640, 7
    %v642 = vsub.s32 0, %v641
    %v643 = vrot.slane %v638, %v642
    %v644 = vadd.f32 %v634, %v643
    %vm645 = vcmask 57344
    %646 = vst.msk [vmem:[#allocation3] sm:$0x1] %vm645, %v644
    // Predicated region
    $region38: #{tpu_custom_call.1} parent=1 // pred_check
      _
    $region39: #{tpu_custom_call.1} parent=1 // pred_check_branch
      %648 = sbr.rel (0) target = $region41
    $region40: #{tpu_custom_call.1} parent=1 // pred_region
      %s650 = ssub.s32 16, 16
      %651 = vsyncadd [#allocation4], %s650
      %s653 = sshll.u32 [#allocation3], 4
      %s654 = int_to_ptr.vmem [resolvable:$true] %s653
      %656 = dma.vmem_to_hbm [thread:$0]  %s654, 16, %s9, [#allocation4]
    $region41: #{tpu_custom_call.1} parent=1 // pred_fallthru
      _
    // Predicated region
    $region42: #{tpu_custom_call.1} parent=1 // pred_check
      _
    $region43: #{tpu_custom_call.1} parent=1 // pred_check_branch
      %658 = sbr.rel (0) target = $region45
    $region44: #{tpu_custom_call.1} parent=1 // pred_region
      %659 = dma.done [#allocation4], 16
    $region45: #{tpu_custom_call.1} parent=1 // pred_fallthru
      _
    %660 = vsyncpa [#allocation4], 1

</llo_original>
